<compile_context>
chip_gen: v7x
topology: tpu7x:2x2x1
jax: 0.10.0
libtpu: 0.0.40
codegen_flags: <defaults>
</compile_context>

<pallas_src>
import jax
import jax.numpy as jnp
from jax.experimental import pallas as pl
from jax.experimental.pallas import tpu as pltpu


def primary_caps_kernel(x_ref, fct_ref, o_ref):
    # x_ref   : [TB, TM]        batch/feature tile of the input
    # fct_ref : [D+1, TM]       feature tile of [fc^T ; ones]
    # o_ref   : [TB, D+1, TM]
    # out[b, d, m] = x[b, m] * fct[d, m]   (pure VPU broadcast-multiply)
    o_ref[...] = x_ref[...][:, None, :] * fct_ref[...][None, :, :]


def _vmem_limits():
    """(vmem_limit_bytes, double-buffered block budget) for the local chip."""
    cap = 128 * 1024 * 1024  # v5e/v6e default
    try:
        info = pltpu.get_tpu_info()
        cap = int(getattr(info, "vmem_capacity_bytes", cap))
    except Exception:
        pass
    # Scoped limit: half of physical, capped at 64 MiB.
    #   v7x (64 MiB physical)  -> 32 MiB limit, 24 MiB block budget
    #   v5e/v6e (128 MiB)      -> 64 MiB limit, 48 MiB block budget
    limit = min(cap // 2, 64 * 1024 * 1024)
    budget = (limit * 3) // 4
    return limit, budget


def _lane_tiles(M):
    """Candidate lane (feature) tile sizes, preferred (largest) first."""
    cands = []
    if M <= 4096:
        cands.append(M)                      # full axis: always a legal block dim
    t = min((M // 128) * 128, 2048)          # 128-aligned tiles
    while t >= 128:
        if t not in cands:
            cands.append(t)
        t //= 2
    return cands or [M]


def _batch_tiles(B):
    """Candidate batch tile sizes, preferred (largest) first."""
    cands = []
    if B <= 1024:
        cands.append(B)                      # full axis: always legal
    t = min((B // 8) * 8, 512)               # 8-aligned tiles
    while t >= 8:
        if t not in cands:
            cands.append(t)
        t //= 2
    return cands or [B]


def _choose_tiles(B, M, d_out, itemsize, budget_bytes):
    """Pick (TB, TM): largest tiles fitting the budget, preferring >=2 grid
    points (both v7x TensorCores get work) and shrinking TB before TM."""
    tm_cands = _lane_tiles(M)
    tb_cands = _batch_tiles(B)

    def blk_bytes(tb, tm):
        # double-buffered x tile + weight tile + output tile
        return 2 * itemsize * (tb * tm + d_out * tm + tb * d_out * tm)

    for require_multi in (True, False):
        for tm in tm_cands:
            for tb in tb_cands:              # shrinking TB first within each TM
                if blk_bytes(tb, tm) > budget_bytes:
                    continue
                if require_multi and pl.cdiv(B, tb) * pl.cdiv(M, tm) < 2:
                    continue
                return tb, tm
    return tb_cands[-1], tm_cands[-1]        # smallest tiles as a last resort


def primary_capsule_generator(x, fc):
    """x: [B, M], fc: [M, D]  ->  [B, D+1, M] (same layout as the PyTorch op)."""
    B, M = x.shape
    Mf, D = fc.shape
    assert Mf == M, (Mf, M)
    d_out = D + 1

    # Match PyTorch type promotion (einsum promotes mixed dtypes).
    out_dtype = jnp.result_type(x.dtype, fc.dtype)
    x = x.astype(out_dtype)

    # Weight slab [fc^T ; ones] -> [D+1, M]. The ones row reproduces the
    # torch.cat([out, x[:, :, None]]) "identity" capsule. No sublane padding:
    # the capsule block dim equals the full array dim, which is always legal.
    fct = jnp.concatenate(
        [fc.T.astype(out_dtype), jnp.ones((1, M), out_dtype)], axis=0
    )

    itemsize = jnp.dtype(out_dtype).itemsize
    vmem_limit, budget = _vmem_limits()
    TB, TM = _choose_tiles(B, M, d_out, itemsize, budget)
    # m outer, b inner: the fct block index is constant along the inner axis,
    # so each [D+1, TM] weight tile is DMA'd only once.
    grid = (pl.cdiv(M, TM), pl.cdiv(B, TB))

    cost = pl.CostEstimate(
        flops=B * d_out * M,
        transcendentals=0,
        bytes_accessed=itemsize * (B * M + d_out * M + B * d_out * M),
    )

    return pl.pallas_call(
        primary_caps_kernel,
        out_shape=jax.ShapeDtypeStruct((B, d_out, M), out_dtype),
        grid=grid,
        in_specs=[
            pl.BlockSpec((TB, TM), lambda m, b: (b, m)),
            pl.BlockSpec((d_out, TM), lambda m, b: (0, m)),
        ],
        out_specs=pl.BlockSpec((TB, d_out, TM), lambda m, b: (b, 0, m)),
        compiler_params=pltpu.CompilerParams(
            dimension_semantics=("parallel", "parallel"),
            vmem_limit_bytes=vmem_limit,
        ),
        cost_estimate=cost,
    )(x, fct)


def primary_capsule_generator_ref(x, fc):
    """Pure-JAX reference mirroring the PyTorch forward exactly."""
    out_dtype = jnp.result_type(x.dtype, fc.dtype)
    x = x.astype(out_dtype)
    fc = fc.astype(out_dtype)
    out = jnp.einsum("bm,md->bmd", x, fc)                  # [B, M, D]
    out = jnp.concatenate([out, x[:, :, None]], axis=-1)   # [B, M, D+1]
    return jnp.swapaxes(out, -1, -2)                       # [B, D+1, M]


def _check(x, fc, atol=1e-6):
    out = jax.block_until_ready(primary_capsule_generator(x, fc))
    ref = primary_capsule_generator_ref(x, fc)
    assert out.shape == ref.shape, (out.shape, ref.shape)
    assert out.dtype == ref.dtype, (out.dtype, ref.dtype)
    assert jnp.allclose(out, ref, atol=atol, rtol=atol), "mismatch vs reference"


if __name__ == "__main__":
    key = jax.random.PRNGKey(0)
    kx, kfc = jax.random.split(key)

    # Small shapes consistent with the module: batch=8, num_feature=256,
    # capsule_dim=7 (capsule axis D+1 = 8).
    B, M, D = 8, 256, 7
    x = jax.random.normal(kx, (B, M), dtype=jnp.float32)
    fc = jax.random.normal(kfc, (M, D), dtype=jnp.float32)  # nn.Parameter(randn(M, D))
    _check(x, fc)

    # Ragged capsule axis (D+1 = 5, not a multiple of 8): unpadded output path.
    B2, M2, D2 = 32, 512, 4
    x2 = jax.random.normal(kx, (B2, M2), dtype=jnp.float32)
    fc2 = jax.random.normal(kfc, (M2, D2), dtype=jnp.float32)
    _check(x2, fc2)

    # Non-divisible batch/feature dims: masked tail blocks via pl.cdiv grid.
    B3, M3, D3 = 12, 300, 4
    x3 = jax.random.normal(kx, (B3, M3), dtype=jnp.float32)
    fc3 = jax.random.normal(kfc, (M3, D3), dtype=jnp.float32)
    _check(x3, fc3)

    # Mixed dtype: bf16 activations with f32 parameters promote to f32,
    # matching torch.einsum promotion.
    x4 = jax.random.normal(kx, (B, M), dtype=jnp.bfloat16)
    _check(x4, fc)

    print("KERNEL_OK")
</pallas_src>

<mosaic_0001>
module attributes {stable_mosaic.version = 11 : i64} {
  func.func @primary_caps_kernel(%arg0: i32, %arg1: i32, %arg2: memref<8x128xf32, #tpu.memory_space<vmem>>, %arg3: memref<8x128xf32, #tpu.memory_space<vmem>>, %arg4: memref<8x8x128xf32, #tpu.memory_space<vmem>>) attributes {dimension_semantics = [#tpu.dimension_semantics<parallel>, #tpu.dimension_semantics<parallel>], iteration_bounds = array<i64: 2, 1>, scalar_prefetch = 0 : i64, scratch_operands = 0 : i64, tpu.core_type = #tpu.core_type<tc>, window_params = [{transform_indices = @transform_0, window_bounds = array<i64: 8, 128>}, {transform_indices = @transform_1, window_bounds = array<i64: 8, 128>}, {transform_indices = @transform_2, window_bounds = array<i64: 8, 8, 128>}]} {
    %c0 = arith.constant 0 : index
    %c0_0 = arith.constant 0 : index
    %0 = vector.load %arg2[%c0, %c0_0] : memref<8x128xf32, #tpu.memory_space<vmem>>, vector<8x128xf32>
    %1 = vector.shape_cast %0 : vector<8x128xf32> to vector<8x1x128xf32>
    %c0_1 = arith.constant 0 : index
    %c0_2 = arith.constant 0 : index
    %2 = vector.load %arg3[%c0_1, %c0_2] : memref<8x128xf32, #tpu.memory_space<vmem>>, vector<8x128xf32>
    %3 = vector.shape_cast %2 : vector<8x128xf32> to vector<1x8x128xf32>
    %4 = vector.broadcast %1 : vector<8x1x128xf32> to vector<8x8x128xf32>
    %5 = vector.broadcast %3 : vector<1x8x128xf32> to vector<8x8x128xf32>
    %6 = arith.mulf %4, %5 : vector<8x8x128xf32>
    %c0_3 = arith.constant 0 : index
    %c0_4 = arith.constant 0 : index
    %c0_5 = arith.constant 0 : index
    %7 = vector.load %arg4[%c0_3, %c0_4, %c0_5] : memref<8x8x128xf32, #tpu.memory_space<vmem>>, vector<8x8x128xf32>
    tpu.vector_store %arg4[%c0_3, %c0_4, %c0_5], %6 {strides = array<i32>} : memref<8x8x128xf32, #tpu.memory_space<vmem>>, vector<8x8x128xf32>,
    return
  }
  func.func @transform_0(%arg0: i32, %arg1: i32) -> (i32, i32) {
    %c0_i32 = arith.constant 0 : i32
    return %arg1, %arg0 : i32, i32
  }
  func.func @transform_1(%arg0: i32, %arg1: i32) -> (i32, i32) {
    %c0_i32 = arith.constant 0 : i32
    %c0_i32_0 = arith.constant 0 : i32
    return %c0_i32, %arg0 : i32, i32
  }
  func.func @transform_2(%arg0: i32, %arg1: i32) -> (i32, i32, i32) {
    %c0_i32 = arith.constant 0 : i32
    %c0_i32_0 = arith.constant 0 : i32
    return %arg1, %c0_i32, %arg0 : i32, i32, i32
  }
}

</mosaic_0001>

<llo_original>
// kernel: tpu_custom_call.1
$region0: #{tpu_custom_call.1}
  #allocation0 [shape = 'u32[]', space=smem, size = 0x4, offset = 0x4, fixed_abs, tag = 'smem constant byte address 0x4 - core index']
  #allocation1 [shape = 'u32[144,128]{1,0:T(1,128)}', space=vmem, size = 0x12000, scoped, tag = 'internal scratch']
  %s0 = inlined_call_operand.hbm [shape: f32[8,256], index: 0, kind: input, shape index: {}]
  %s1 = inlined_call_operand.hbm [shape: f32[8,256], index: 1, kind: input, shape index: {}]
  %s2 = inlined_call_operand.hbm [shape: f32[8,8,256], index: 2, kind: output, shape index: {}]
  %s3 = sld [smem:[#allocation0]]
  $region49: #{tpu_custom_call.1} parent=0
    _
  %s5 = ssub.s32 1, %s3
  %s6 = scalar_select 0, %s5, %s3
  $region1: #{tpu_custom_call.1} parent=0
    #allocation2 [shape = 'u8[8192]{0}', space=vmem, size = 0x2000, scoped, tag = 'input window, operand 0']
    #allocation3 [shape = 's32[2]{0}', space=sflag, size = 0x8, scoped, tag = 'scoped memory for tpu_custom_call.1']
    #allocation4 [shape = 's32[2]{0}', space=sflag, size = 0x8, scoped, tag = 'scoped memory for tpu_custom_call.1']
    #allocation5 [shape = 'u8[8192]{0}', space=vmem, size = 0x2000, scoped, tag = 'input window, operand 1']
    #allocation6 [shape = 's32[2]{0}', space=sflag, size = 0x8, scoped, tag = 'scoped memory for tpu_custom_call.1']
    #allocation7 [shape = 'u8[65536]{0}', space=vmem, size = 0x10000, scoped, tag = 'output window, operand 0']
    %7 = vsyncpa [#allocation3], 0
    %s8 = scalar_lea.sflag [#allocation3], 1
    %9 = vsyncpa %s8, 0
    %10 = vsyncpa [#allocation6], 0
    %s11 = scalar_lea.sflag [#allocation6], 1
    %12 = vsyncpa %s11, 0
    %13 = vsyncpa [#allocation4], 0
    %s14 = scalar_lea.sflag [#allocation4], 1
    %15 = vsyncpa %s14, 0
    loop: start=0, step=1, limit=4
    $region2: #{tpu_custom_call.1} parent=1 // loop_pre_header
      _
    $region3: #{tpu_custom_call.1} parent=1 // loop_header
      %s17 = sphi 0, %s21
      %p18 = scmp.ge.s32.totalorder %s17, 4
      %s24 = sphi 0, %s36
      %s25 = sphi 0, %s32
      %s26 = sphi 0, %s24
      %s27 = sphi 0, %s25
      %s28 = sphi 0, %s26
      %s29 = sphi 0, %s27
      %s41 = sphi 0, %s43
      %s44 = sphi 0, %s41
      %s45 = sphi 0, %s44
      %s61 = sphi 0, %s45
      %s67 = sphi 0, %s69
      %s70 = sphi 0, %s67
      %s71 = sphi 0, %s70
      %s87 = sphi 0, %s71
      %s95 = sphi 0, %s97
      %s98 = sphi 0, %s95
      %s99 = sphi 0, %s98
      %s115 = sphi 0, %s99
    $region4: #{tpu_custom_call.1} parent=1 // loop_header_branch
      %20 = sbr.rel (%p18) target = $region8
    $region5: #{tpu_custom_call.1} parent=1 // loop_body
      %s22 = ssub.s32 %s17, 1
      %s23 = ssub.s32 %s17, 2
      %s30 = sadd.s32 1, %s25
      %p31 = scmp.ge.s32.totalorder %s30, 1
      %s32 = scalar_select %p31, 0, %s30
      %s33 = sadd.s32 1, %s24
      %s34 = scalar_select %p31, %s33, %s24
      %p35 = scmp.ge.s32.totalorder %s34, 2
      %s36 = scalar_select %p35, 0, %s34
      %s37 = ssub.s32 %s25, %s32
      %s38 = ssub.s32 %s24, %s36
      %s39 = sor.u32 %s37, %s38
      %p40 = scmp.eq.s32.totalorder %s39, 0
      %s42 = sadd.s32 %s41, 1
      %s43 = scalar_select %p40, %s41, %s42
      %p46 = pneg %p40
      %p47 = scmp.eq.s32.totalorder %s17, 1
      %p48 = por %p46, %p47
      %p49 = scmp.ne.s32.totalorder %s41, %s44
      %p50 = scmp.eq.s32.totalorder %s17, 0
      %p51 = por %p49, %p50
      %p52 = scmp.ne.s32.totalorder %s41, %s44
      %p53 = scmp.eq.s32.totalorder %s22, 1
      %p54 = por %p52, %p53
      %p55 = scmp.ne.s32.totalorder %s44, %s45
      %p56 = scmp.eq.s32.totalorder %s22, 0
      %p57 = por %p55, %p56
      %p58 = scmp.ne.s32.totalorder %s44, %s45
      %p59 = scmp.eq.s32.totalorder %s23, 1
      %p60 = por %p58, %p59
      %p62 = scmp.ne.s32.totalorder %s45, %s61
      %p63 = scmp.eq.s32.totalorder %s23, 0
      %p64 = por %p62, %p63
      %s65 = ssub.s32 %s24, %s36
      %p66 = scmp.eq.s32.totalorder %s65, 0
      %s68 = sadd.s32 %s67, 1
      %s69 = scalar_select %p66, %s67, %s68
      %p72 = pneg %p66
      %p73 = scmp.eq.s32.totalorder %s17, 1
      %p74 = por %p72, %p73
      %p75 = scmp.ne.s32.totalorder %s67, %s70
      %p76 = scmp.eq.s32.totalorder %s17, 0
      %p77 = por %p75, %p76
      %p78 = scmp.ne.s32.totalorder %s67, %s70
      %p79 = scmp.eq.s32.totalorder %s22, 1
      %p80 = por %p78, %p79
      %p81 = scmp.ne.s32.totalorder %s70, %s71
      %p82 = scmp.eq.s32.totalorder %s22, 0
      %p83 = por %p81, %p82
      %p84 = scmp.ne.s32.totalorder %s70, %s71
      %p85 = scmp.eq.s32.totalorder %s23, 1
      %p86 = por %p84, %p85
      %p88 = scmp.ne.s32.totalorder %s71, %s87
      %p89 = scmp.eq.s32.totalorder %s23, 0
      %p90 = por %p88, %p89
      %s91 = ssub.s32 %s25, %s32
      %s92 = ssub.s32 %s24, %s36
      %s93 = sor.u32 %s91, %s92
      %p94 = scmp.eq.s32.totalorder %s93, 0
      %s96 = sadd.s32 %s95, 1
      %s97 = scalar_select %p94, %s95, %s96
      %p100 = pneg %p94
      %p101 = scmp.eq.s32.totalorder %s17, 1
      %p102 = por %p100, %p101
      %p103 = scmp.ne.s32.totalorder %s95, %s98
      %p104 = scmp.eq.s32.totalorder %s17, 0
      %p105 = por %p103, %p104
      %p106 = scmp.ne.s32.totalorder %s95, %s98
      %p107 = scmp.eq.s32.totalorder %s22, 1
      %p108 = por %p106, %p107
      %p109 = scmp.ne.s32.totalorder %s98, %s99
      %p110 = scmp.eq.s32.totalorder %s22, 0
      %p111 = por %p109, %p110
      %p112 = scmp.ne.s32.totalorder %s98, %s99
      %p113 = scmp.eq.s32.totalorder %s23, 1
      %p114 = por %p112, %p113
      %p116 = scmp.ne.s32.totalorder %s99, %s115
      %p117 = scmp.eq.s32.totalorder %s23, 0
      %p118 = por %p116, %p117
      %p119 = scmp.le.s32.totalorder 1, %s17
      %p120 = scmp.lt.s32.totalorder %s17, 3
      %p121 = pnand %p119, %p120
      %p122 = pneg %p121
      // Predicated region
      $region9: #{tpu_custom_call.1} parent=5 // pred_check
        _
      $region10: #{tpu_custom_call.1} parent=5 // pred_check_branch
        %124 = sbr.rel (%p121) target = $region12
      $region11: #{tpu_custom_call.1} parent=5 // pred_region
        %s125 = ssub.s32 %s17, 1
      $region12: #{tpu_custom_call.1} parent=5 // pred_fallthru
        _
      %p126 = scmp.lt.s32.totalorder %s17, 2
      // Predicated region
      $region13: #{tpu_custom_call.1} parent=5 // pred_check
        %p127 = pneg %p126
      $region14: #{tpu_custom_call.1} parent=5 // pred_check_branch
        %129 = sbr.rel (%p127) target = $region16
      $region15: #{tpu_custom_call.1} parent=5 // pred_region
        // Predicated region
        $region17: #{tpu_custom_call.1} parent=15 // pred_check
          %p130 = pneg %p51
        $region18: #{tpu_custom_call.1} parent=15 // pred_check_branch
          %132 = sbr.rel (%p130) target = $region20
        $region19: #{tpu_custom_call.1} parent=15 // pred_region
          %s133 = sand.u32 %s41, 1
          %s134 = scalar_lea.sflag [#allocation3], %s133
          %s135 = sand.u32 %s41, 1
          %s136 = smul.addr %s135, 8
          %s137 = scalar_lea.vmem [#allocation2], %s136
          %s139 = ssub.s32 128, 128
          %140 = vsyncadd %s134, %s139
          %s141 = smul.addr %s25, 2
          %s142 = sadd.s32 %s24, %s141
          %s143 = smul.addr %s142, 128
          %s144 = scalar_lea.hbm %s0, %s143
          %s146 = sshll.u32 %s137, 4
          %s147 = int_to_ptr.vmem [resolvable:$true] %s146
          %149 = dma.hbm_to_vmem [thread:$0]  %s144, 128, %s147, %s134
        $region20: #{tpu_custom_call.1} parent=15 // pred_fallthru
          _
        // Predicated region
        $region21: #{tpu_custom_call.1} parent=15 // pred_check
          %p150 = pneg %p77
        $region22: #{tpu_custom_call.1} parent=15 // pred_check_branch
          %152 = sbr.rel (%p150) target = $region24
        $region23: #{tpu_custom_call.1} parent=15 // pred_region
          %s153 = sand.u32 %s67, 1
          %s154 = scalar_lea.sflag [#allocation6], %s153
          %s155 = sand.u32 %s67, 1
          %s156 = smul.addr %s155, 8
          %s157 = scalar_lea.vmem [#allocation5], %s156
          %s159 = ssub.s32 128, 128
          %160 = vsyncadd %s154, %s159
          %s161 = smul.addr %s24, 128
          %s162 = scalar_lea.hbm %s1, %s161
          %s164 = sshll.u32 %s157, 4
          %s165 = int_to_ptr.vmem [resolvable:$true] %s164
          %167 = dma.hbm_to_vmem [thread:$0]  %s162, 128, %s165, %s154
        $region24: #{tpu_custom_call.1} parent=15 // pred_fallthru
          _
      $region16: #{tpu_custom_call.1} parent=5 // pred_fallthru
        _
      %p168 = scmp.le.s32.totalorder 1, %s17
      %p169 = scmp.lt.s32.totalorder %s17, 3
      %p170 = pnand %p168, %p169
      %p171 = pneg %p170
      // Predicated region
      $region25: #{tpu_custom_call.1} parent=5 // pred_check
        _
      $region26: #{tpu_custom_call.1} parent=5 // pred_check_branch
        %173 = sbr.rel (%p170) target = $region28
      $region27: #{tpu_custom_call.1} parent=5 // pred_region
        %s174 = ssub.s32 %s17, 1
        %s175 = sand.u32 %s44, 1
        %s176 = scalar_lea.sflag [#allocation3], %s175
        %s177 = sand.u32 %s44, 1
        %s178 = smul.addr %s177, 8
        %s179 = scalar_lea.vmem [#allocation2], %s178
        // Predicated region
        $region29: #{tpu_custom_call.1} parent=27 // pred_check
          %p180 = pneg %p57
        $region30: #{tpu_custom_call.1} parent=27 // pred_check_branch
          %182 = sbr.rel (%p180) target = $region32
        $region31: #{tpu_custom_call.1} parent=27 // pred_region
          %183 = dma.done %s176, 128
        $region32: #{tpu_custom_call.1} parent=27 // pred_fallthru
          _
        %s184 = sand.u32 %s70, 1
        %s185 = scalar_lea.sflag [#allocation6], %s184
        %s186 = sand.u32 %s70, 1
        %s187 = smul.addr %s186, 8
        %s188 = scalar_lea.vmem [#allocation5], %s187
        // Predicated region
        $region33: #{tpu_custom_call.1} parent=27 // pred_check
          %p189 = pneg %p83
        $region34: #{tpu_custom_call.1} parent=27 // pred_check_branch
          %191 = sbr.rel (%p189) target = $region36
        $region35: #{tpu_custom_call.1} parent=27 // pred_region
          %192 = dma.done %s185, 128
        $region36: #{tpu_custom_call.1} parent=27 // pred_fallthru
          _
        %s193 = sand.u32 %s44, 1
        %s194 = scalar_lea.sflag [#allocation3], %s193
        %s195 = sand.u32 %s44, 1
        %s196 = smul.addr %s195, 8
        %s197 = scalar_lea.vmem [#allocation2], %s196
        %p198 = pneg %p57
        %p199 = pneg %p54
        %s200 = sand.u32 %s70, 1
        %s201 = scalar_lea.sflag [#allocation6], %s200
        %s202 = sand.u32 %s70, 1
        %s203 = smul.addr %s202, 8
        %s204 = scalar_lea.vmem [#allocation5], %s203
        %p205 = pneg %p83
        %p206 = pneg %p80
        %p207 = pneg %p111
        %p208 = pneg %p108
        %s209 = sand.u32 %s98, 1
        %s210 = scalar_lea.sflag [#allocation4], %s209
        %s211 = sand.u32 %s98, 1
        %s212 = smul.addr %s211, 64
        %s213 = scalar_lea.vmem [#allocation7], %s212
        %s214 = smul.u32 8, %s27
        %v215 = vld [vmem:[%s179] sm:$0xff]
        %v217 = vcombine.high %v215, %v215
        %v219 = vunpack.c.l.s4 1966171168
        %v220 = vunpack.c.0.s8 %v219
        %v221 = vlaneseq
        %v222 = vshrl.u32 %v221, 7
        %v223 = vsub.s32 %v220, %v222
        %v224 = vrot.slane %v215, %v223
        %v226 = vunpack.c.l.s4 1966171168
        %v227 = vunpack.c.0.s8 %v226
        %v228 = vlaneseq
        %v229 = vshrl.u32 %v228, 7
        %v230 = vsub.s32 %v227, %v229
        %v231 = vrot.slane %v217, %v230
        %v232 = vcombine.high %v224, %v224
        %v233 = vcombine.high %v231, %v231
        %v235 = vunpack.c.l.s4 1966171168
        %v236 = vunpack.c.0.s8 %v235
        %v237 = vlaneseq
        %v238 = vshrl.u32 %v237, 7
        %v239 = vsub.s32 %v236, %v238
        %v240 = vrot.slane %v224, %v239
        %v242 = vunpack.c.l.s4 1966171168
        %v243 = vunpack.c.0.s8 %v242
        %v244 = vlaneseq
        %v245 = vshrl.u32 %v244, 7
        %v246 = vsub.s32 %v243, %v245
        %v247 = vrot.slane %v231, %v246
        %v249 = vunpack.c.l.s4 1966171168
        %v250 = vunpack.c.0.s8 %v249
        %v251 = vlaneseq
        %v252 = vshrl.u32 %v251, 7
        %v253 = vsub.s32 %v250, %v252
        %v254 = vrot.slane %v232, %v253
        %v256 = vunpack.c.l.s4 1966171168
        %v257 = vunpack.c.0.s8 %v256
        %v258 = vlaneseq
        %v259 = vshrl.u32 %v258, 7
        %v260 = vsub.s32 %v257, %v259
        %v261 = vrot.slane %v233, %v260
        %v262 = vcombine.high %v240, %v240
        %v263 = vcombine.high %v247, %v247
        %v264 = vcombine.high %v254, %v254
        %v265 = vcombine.high %v261, %v261
        %v266 = vld [vmem:[%s188] sm:$0xff]
        %v267 = vlaneseq
        %v268 = vshrl.u32 %v267, 7
        %v269 = vsub.s32 0, %v268
        %v270 = vrot.slane %v240, %v269
        %v271 = vlaneseq
        %v272 = vshrl.u32 %v271, 7
        %v273 = vsub.s32 0, %v272
        %v274 = vrot.slane %v254, %v273
        %v275 = vlaneseq
        %v276 = vshrl.u32 %v275, 7
        %v277 = vsub.s32 0, %v276
        %v278 = vrot.slane %v262, %v277
        %v279 = vlaneseq
        %v280 = vshrl.u32 %v279, 7
        %v281 = vsub.s32 0, %v280
        %v282 = vrot.slane %v264, %v281
        %v283 = vlaneseq
        %v284 = vshrl.u32 %v283, 7
        %v285 = vsub.s32 0, %v284
        %v286 = vrot.slane %v247, %v285
        %v287 = vlaneseq
        %v288 = vshrl.u32 %v287, 7
        %v289 = vsub.s32 0, %v288
        %v290 = vrot.slane %v261, %v289
        %v291 = vlaneseq
        %v292 = vshrl.u32 %v291, 7
        %v293 = vsub.s32 0, %v292
        %v294 = vrot.slane %v263, %v293
        %v295 = vlaneseq
        %v296 = vshrl.u32 %v295, 7
        %v297 = vsub.s32 0, %v296
        %v298 = vrot.slane %v265, %v297
        %v307 = vmul.f32 %v270, %v266
        %v308 = vmul.f32 %v274, %v266
        %v309 = vmul.f32 %v278, %v266
        %v310 = vmul.f32 %v282, %v266
        %v311 = vmul.f32 %v286, %v266
        %v312 = vmul.f32 %v290, %v266
        %v313 = vmul.f32 %v294, %v266
        %v314 = vmul.f32 %v298, %v266
        %315 = vst [vmem:[%s213] sm:$0xff] %v307
        %316 = vst [vmem:[%s213 + $0x8] sm:$0xff] %v308
        %317 = vst [vmem:[%s213 + $0x10] sm:$0xff] %v309
        %318 = vst [vmem:[%s213 + $0x18] sm:$0xff] %v310
        %319 = vst [vmem:[%s213 + $0x20] sm:$0xff] %v311
        %320 = vst [vmem:[%s213 + $0x28] sm:$0xff] %v312
        %321 = vst [vmem:[%s213 + $0x30] sm:$0xff] %v313
        %322 = vst [vmem:[%s213 + $0x38] sm:$0xff] %v314
        %s323 = sand.u32 %s98, 1
        %s324 = scalar_lea.sflag [#allocation4], %s323
        %s325 = sand.u32 %s98, 1
        %s326 = smul.addr %s325, 64
        %s327 = scalar_lea.vmem [#allocation7], %s326
        // Predicated region
        $region37: #{tpu_custom_call.1} parent=27 // pred_check
          %p328 = pneg %p108
        $region38: #{tpu_custom_call.1} parent=27 // pred_check_branch
          %330 = sbr.rel (%p328) target = $region40
        $region39: #{tpu_custom_call.1} parent=27 // pred_region
          %s331 = smul.u32 8, %s27
          %s333 = ssub.s32 1024, 1024
          %334 = vsyncadd %s324, %s333
          %s335 = smul.addr %s331, 2
          %s336 = sadd.s32 %s26, %s335
          %s337 = smul.addr %s336, 128
          %s338 = scalar_lea.hbm %s2, %s337
          %s339 = sshll.u32 %s327, 4
          %s340 = int_to_ptr.vmem [resolvable:$true] %s339
          %345 = dma.vmem_to_hbm [thread:$0]  %s340, 1024, %s338, %s324, 128, 256, 8
        $region40: #{tpu_custom_call.1} parent=27 // pred_fallthru
          _
      $region28: #{tpu_custom_call.1} parent=5 // pred_fallthru
        _
      %p346 = scmp.le.s32.totalorder 2, %s17
      // Predicated region
      $region41: #{tpu_custom_call.1} parent=5 // pred_check
        %p347 = pneg %p346
      $region42: #{tpu_custom_call.1} parent=5 // pred_check_branch
        %349 = sbr.rel (%p347) target = $region44
      $region43: #{tpu_custom_call.1} parent=5 // pred_region
        %s350 = ssub.s32 %s17, 2
        // Predicated region
        $region45: #{tpu_custom_call.1} parent=43 // pred_check
          %p351 = pneg %p114
        $region46: #{tpu_custom_call.1} parent=43 // pred_check_branch
          %353 = sbr.rel (%p351) target = $region48
        $region47: #{tpu_custom_call.1} parent=43 // pred_region
          %s354 = sand.u32 %s99, 1
          %s355 = scalar_lea.sflag [#allocation4], %s354
          %s356 = sand.u32 %s99, 1
          %s357 = smul.addr %s356, 64
          %s358 = scalar_lea.vmem [#allocation7], %s357
          %359 = dma.done %s355, 1024
        $region48: #{tpu_custom_call.1} parent=43 // pred_fallthru
          _
      $region44: #{tpu_custom_call.1} parent=5 // pred_fallthru
        _
    $region6: #{tpu_custom_call.1} parent=1 // loop_footer
      %s21 = sadd.s32 1, %s17
    $region7: #{tpu_custom_call.1} parent=1 // loop_footer_branch
      %16 = sbr.rel target = $region3
    $region8: #{tpu_custom_call.1} parent=1 // loop_exit
      _
    %360 = vsyncpa [#allocation3], 1
    %s361 = scalar_lea.sflag [#allocation3], 1
    %362 = vsyncpa %s361, 1
    %363 = vsyncpa [#allocation6], 1
    %s364 = scalar_lea.sflag [#allocation6], 1
    %365 = vsyncpa %s364, 1
    %366 = vsyncpa [#allocation4], 1
    %s367 = scalar_lea.sflag [#allocation4], 1
    %368 = vsyncpa %s367, 1

</llo_original>
